<compile_context>
chip_gen: v7x
topology: tpu7x:2x2x1
jax: 0.10.0
libtpu: 0.0.40
codegen_flags: <defaults>
</compile_context>

<pallas_src>
import functools

import jax
import jax.numpy as jnp
import numpy as np
from jax.experimental import pallas as pl
from jax.experimental.pallas import tpu as pltpu

_SUBLANE = 8
_TILE_PAIR_BYTES = 6 * 1024 * 1024    # target (in + out) bytes of ONE row tile
_VMEM_LIMIT_BYTES = 40 * 1024 * 1024  # explicit scoped-VMEM cap (ok on v5e/v6e/v7x)


def _round_up(x, m):
    return (x + m - 1) // m * m


def _kernel_static_taps(x_ref, o_ref, *, terms, common_scale, l_out):
    """Taps baked as Python constants.

    terms: ((tap_index, coeff), ...) with zero taps removed; any common |tap|
    magnitude and the 1/resol factor are folded into `common_scale`.
    """
    x = x_ref[...].astype(jnp.float32)
    acc = None
    for t, c in terms:
        xt = x[:, t:t + l_out]
        if acc is None:
            acc = xt if c == 1.0 else (-xt if c == -1.0 else c * xt)
        elif c == 1.0:
            acc = acc + xt
        elif c == -1.0:
            acc = acc - xt
        else:
            acc = acc + c * xt
    if acc is None:                                   # all-zero filter
        acc = jnp.zeros((x.shape[0], l_out), jnp.float32)
    if common_scale != 1.0:
        acc = acc * common_scale
    o_ref[...] = acc.astype(o_ref.dtype)


def _kernel_smem_taps(x_ref, w_ref, o_ref, *, kernel_size, l_out):
    """Fallback when the filter / resol are traced: (1, K) taps in SMEM,
    already pre-scaled by 1/resol."""
    x = x_ref[...].astype(jnp.float32)
    acc = w_ref[0, 0] * x[:, 0:l_out]
    for t in range(1, kernel_size):
        acc = acc + w_ref[0, t] * x[:, t:t + l_out]
    o_ref[...] = acc.astype(o_ref.dtype)


def conv1d_derivative(x, der_filter, resol, *, max_rows_per_tile=8192):
    """x: (N, 1, L); der_filter: (1, 1, K) (array or nested list); resol scalar.
    Returns (N, 1, L-K+1) float32."""
    n, c, l = x.shape
    assert c == 1, "Conv1dDerivative uses a single input channel"
    k = int(np.shape(der_filter)[-1])
    l_out = l - (k - 1)
    assert l_out >= 1, f"kernel_size={k} larger than input length {l}"

    # Stream bf16 / f32 inputs as-is (bf16 halves the dominant HBM read);
    # anything else is cast to f32 on the host.
    if x.dtype not in (jnp.float32, jnp.bfloat16):
        x = x.astype(jnp.float32)
    x2 = x.reshape(n, l)                       # metadata-only (C == 1)
    out_dtype = jnp.float32

    # ---- batch row tile --------------------------------------------------
    in_itemsize = x2.dtype.itemsize
    out_itemsize = np.dtype(out_dtype).itemsize
    bytes_per_row = in_itemsize * l + out_itemsize * l_out
    if n <= _SUBLANE:
        tn = n                                 # block == full batch dim
    else:
        tn_vmem = max(_SUBLANE,
                      (_TILE_PAIR_BYTES // bytes_per_row) // _SUBLANE * _SUBLANE)
        # Keep >= 2 (>= 4 when the batch allows) grid steps so v7x's two
        # TensorCores both stream the "parallel" batch axis.
        target_steps = 4 if n >= 4 * _SUBLANE else 2
        tn_mc = max(_SUBLANE, _round_up(pl.cdiv(n, target_steps), _SUBLANE))
        tn_user = max(_SUBLANE, int(max_rows_per_tile) // _SUBLANE * _SUBLANE)
        tn = min(tn_vmem, tn_mc, tn_user, (n // _SUBLANE) * _SUBLANE)
    grid = (pl.cdiv(n, tn),)

    x_spec = pl.BlockSpec((tn, l), lambda i: (i, 0))
    common_kwargs = dict(
        out_shape=jax.ShapeDtypeStruct((n, l_out), out_dtype),
        grid=grid,
        out_specs=pl.BlockSpec((tn, l_out), lambda i: (i, 0)),
        compiler_params=pltpu.CompilerParams(
            dimension_semantics=("parallel",),          # v7x megacore
            vmem_limit_bytes=_VMEM_LIMIT_BYTES,
        ),
        cost_estimate=pl.CostEstimate(
            flops=2 * k * n * l_out,
            bytes_accessed=in_itemsize * n * l + out_itemsize * n * l_out,
            transcendentals=0,
        ),
    )

    # ---- taps: bake as constants when concrete, else SMEM fallback --------
    try:
        taps_host = np.asarray(der_filter, dtype=np.float64).reshape(-1)
        inv_res = 1.0 / float(resol)
        static_taps = True
    except (TypeError,
            jax.errors.ConcretizationTypeError,
            jax.errors.TracerArrayConversionError):
        static_taps = False

    if static_taps:
        nz = [(t, float(taps_host[t])) for t in range(k) if float(taps_host[t]) != 0.0]
        mags = sorted({abs(cf) for _, cf in nz})
        if len(mags) == 1:
            common_scale = mags[0] * inv_res
            terms = tuple((t, 1.0 if cf > 0 else -1.0) for t, cf in nz)
        else:
            common_scale = 1.0
            terms = tuple((t, cf * inv_res) for t, cf in nz)
        kernel = functools.partial(_kernel_static_taps, terms=terms,
                                   common_scale=common_scale, l_out=l_out)
        out2 = pl.pallas_call(kernel, in_specs=[x_spec], **common_kwargs)(x2)
    else:
        w = (jnp.asarray(der_filter, jnp.float32).reshape(1, k)
             / jnp.asarray(resol, jnp.float32))
        kernel = functools.partial(_kernel_smem_taps, kernel_size=k, l_out=l_out)
        out2 = pl.pallas_call(
            kernel,
            in_specs=[x_spec,
                      pl.BlockSpec(memory_space=pltpu.MemorySpace.SMEM)],
            **common_kwargs,
        )(x2, w)

    return out2.reshape(n, 1, l_out)


def _reference(x, der_filter, resol):
    # Pure-JAX reference: valid cross-correlation (matches torch Conv1d), / resol.
    n, _, l = x.shape
    k = int(np.shape(der_filter)[-1])
    l_out = l - (k - 1)
    w = jnp.asarray(der_filter, jnp.float32).reshape(k)
    xs = x.astype(jnp.float32)
    acc = jnp.zeros((n, l_out), jnp.float32)
    for t in range(k):
        acc = acc + w[t] * xs[:, 0, t:t + l_out]
    return (acc / jnp.asarray(resol, jnp.float32)).reshape(n, 1, l_out)


if __name__ == "__main__":
    key = jax.random.PRNGKey(0)
    k1, k2, k3 = jax.random.split(key, 3)

    # Central-difference time-derivative filter, as used in the Burgers script.
    der_filter = jnp.array([[[-1.0, 0.0, 1.0]]], dtype=jnp.float32)
    dt = 0.01
    resol = 2.0 * dt

    # Case 1: module-consistent small shape (batch=2, 1 channel, seq=16); n<8 path.
    x1 = jax.random.normal(k1, (2, 1, 16), dtype=jnp.float32)
    out1 = jax.block_until_ready(conv1d_derivative(x1, der_filter, resol))
    np.testing.assert_allclose(np.asarray(out1),
                               np.asarray(_reference(x1, der_filter, resol)),
                               rtol=1e-5, atol=1e-5)

    # Case 2: multi-step batch grid with a trailing partial row block and a
    # non-128-multiple L (masked lane stores, no host pad/slice).
    x2 = jax.random.normal(k2, (20, 1, 131), dtype=jnp.float32)
    out2 = jax.block_until_ready(
        conv1d_derivative(x2, der_filter, resol, max_rows_per_tile=8))
    np.testing.assert_allclose(np.asarray(out2),
                               np.asarray(_reference(x2, der_filter, resol)),
                               rtol=1e-5, atol=1e-5)

    # Case 3: bf16 input streamed as bf16 (f32 accumulate) + non-uniform taps
    # (second-derivative filter) exercising the general coefficient path.
    lap_filter = jnp.array([[[1.0, -2.0, 1.0]]], dtype=jnp.float32)
    x3 = jax.random.normal(k3, (12, 1, 64), dtype=jnp.bfloat16)
    out3 = jax.block_until_ready(conv1d_derivative(x3, lap_filter, dt * dt))
    np.testing.assert_allclose(np.asarray(out3),
                               np.asarray(_reference(x3, lap_filter, dt * dt)),
                               rtol=2e-2, atol=2e-2)

    # Case 4: traced filter under jit -> SMEM-tap fallback path.
    dyn = jax.jit(lambda xx, ww: conv1d_derivative(xx, ww, resol))
    out4 = jax.block_until_ready(dyn(x1, der_filter))
    np.testing.assert_allclose(np.asarray(out4),
                               np.asarray(_reference(x1, der_filter, resol)),
                               rtol=1e-5, atol=1e-5)

    print("KERNEL_OK")
</pallas_src>

<mosaic_0001>
module attributes {stable_mosaic.version = 11 : i64} {
  func.func @_kernel_static_taps(%arg0: i32, %arg1: memref<2x16xf32, #tpu.memory_space<vmem>>, %arg2: memref<2x14xf32, #tpu.memory_space<vmem>>) attributes {dimension_semantics = [#tpu.dimension_semantics<parallel>], iteration_bounds = array<i64: 1>, scalar_prefetch = 0 : i64, scratch_operands = 0 : i64, tpu.core_type = #tpu.core_type<tc>, window_params = [{transform_indices = @transform_0, window_bounds = array<i64: 2, 16>}, {transform_indices = @transform_1, window_bounds = array<i64: 2, 14>}]} {
    %c0 = arith.constant 0 : index
    %c0_0 = arith.constant 0 : index
    %0 = vector.load %arg1[%c0, %c0_0] : memref<2x16xf32, #tpu.memory_space<vmem>>, vector<2x16xf32>
    %1 = vector.extract_strided_slice %0 {offsets = [0, 0], sizes = [2, 14], strides = [1, 1]} : vector<2x16xf32> to vector<2x14xf32>
    %cst = arith.constant 0.000000e+00 : f32
    %2 = vector.broadcast %cst : f32 to vector<2x14xf32>
    %3 = arith.subf %2, %1 : vector<2x14xf32>
    %4 = vector.extract_strided_slice %0 {offsets = [0, 2], sizes = [2, 14], strides = [1, 1]} : vector<2x16xf32> to vector<2x14xf32>
    %5 = arith.addf %3, %4 : vector<2x14xf32>
    %cst_1 = arith.constant 5.000000e+01 : f32
    %6 = vector.broadcast %cst_1 : f32 to vector<2x14xf32>
    %7 = arith.mulf %5, %6 : vector<2x14xf32>
    %c0_2 = arith.constant 0 : index
    %c0_3 = arith.constant 0 : index
    %8 = vector.load %arg2[%c0_2, %c0_3] : memref<2x14xf32, #tpu.memory_space<vmem>>, vector<2x14xf32>
    tpu.vector_store %arg2[%c0_2, %c0_3], %7 {strides = array<i32>} : memref<2x14xf32, #tpu.memory_space<vmem>>, vector<2x14xf32>,
    return
  }
  func.func @transform_0(%arg0: i32) -> (i32, i32) {
    %c0_i32 = arith.constant 0 : i32
    %c0_i32_0 = arith.constant 0 : i32
    return %arg0, %c0_i32 : i32, i32
  }
  func.func @transform_1(%arg0: i32) -> (i32, i32) {
    %c0_i32 = arith.constant 0 : i32
    %c0_i32_0 = arith.constant 0 : i32
    return %arg0, %c0_i32 : i32, i32
  }
}

</mosaic_0001>

<llo_original>
// kernel: tpu_custom_call.1
$region0: #{tpu_custom_call.1}
  #allocation0 [shape = 'u32[]', space=smem, size = 0x4, offset = 0x4, fixed_abs, tag = 'smem constant byte address 0x4 - core index']
  #allocation1 [shape = 'u32[144,128]{1,0:T(1,128)}', space=vmem, size = 0x12000, scoped, tag = 'internal scratch']
  %s0 = inlined_call_operand.hbm [shape: f32[2,16], index: 0, kind: input, shape index: {}]
  %s1 = inlined_call_operand.hbm [shape: f32[2,14], index: 1, kind: output, shape index: {}]
  %s2 = sld [smem:[#allocation0]]
  $region18: #{tpu_custom_call.1} parent=0
    _
  %s4 = ssub.s32 1, %s2
  %s5 = scalar_select 0, %s4, %s2
  $region1: #{tpu_custom_call.1} parent=0
    #allocation2 [shape = 'u8[1024]{0}', space=vmem, size = 0x400, scoped, tag = 'input window, operand 0, single buffered']
    #allocation3 [shape = 's32[1]{0}', space=sflag, size = 0x4, scoped, tag = 'scoped memory for tpu_custom_call.1']
    #allocation4 [shape = 's32[1]{0}', space=sflag, size = 0x4, scoped, tag = 'scoped memory for tpu_custom_call.1']
    #allocation5 [shape = 'u8[1024]{0}', space=vmem, size = 0x400, scoped, tag = 'output window, operand 0, single buffered']
    %6 = vsyncpa [#allocation3], 0
    %7 = vsyncpa [#allocation4], 0
    // Predicated region
    $region2: #{tpu_custom_call.1} parent=1 // pred_check
      _
    $region3: #{tpu_custom_call.1} parent=1 // pred_check_branch
      %9 = sbr.rel (0) target = $region5
    $region4: #{tpu_custom_call.1} parent=1 // pred_region
      %s11 = ssub.s32 32, 32
      %12 = vsyncadd [#allocation3], %s11
      %s14 = sshll.u32 [#allocation2], 4
      %s15 = int_to_ptr.vmem [resolvable:$true] %s14
      %17 = dma.hbm_to_vmem [thread:$0]  %s0, 32, %s15, [#allocation3]
    $region5: #{tpu_custom_call.1} parent=1 // pred_fallthru
      _
    // Predicated region
    $region6: #{tpu_custom_call.1} parent=1 // pred_check
      _
    $region7: #{tpu_custom_call.1} parent=1 // pred_check_branch
      %19 = sbr.rel (0) target = $region9
    $region8: #{tpu_custom_call.1} parent=1 // pred_region
      %20 = dma.done [#allocation3], 32
    $region9: #{tpu_custom_call.1} parent=1 // pred_fallthru
      _
    %v21 = vld [vmem:[#allocation2] sm:$0x3]
    %v22 = vsub.f32 0.0, %v21
    %24 = vrot.lane.b32.xlu0 %v21, 126
    %v25 = vpop.permute.xlu0 %24
    %v27 = vadd.f32 %v22, %v25
    %v28 = vmul.f32 %v27, 50.0
    %vm29 = vcmask 107520
    %30 = vst.msk [vmem:[#allocation5] sm:$0x3] %vm29, %v28
    // Predicated region
    $region10: #{tpu_custom_call.1} parent=1 // pred_check
      _
    $region11: #{tpu_custom_call.1} parent=1 // pred_check_branch
      %32 = sbr.rel (0) target = $region13
    $region12: #{tpu_custom_call.1} parent=1 // pred_region
      %s34 = ssub.s32 32, 32
      %35 = vsyncadd [#allocation4], %s34
      %s37 = sshll.u32 [#allocation5], 4
      %s38 = int_to_ptr.vmem [resolvable:$true] %s37
      %40 = dma.vmem_to_hbm [thread:$0]  %s38, 32, %s1, [#allocation4]
    $region13: #{tpu_custom_call.1} parent=1 // pred_fallthru
      _
    // Predicated region
    $region14: #{tpu_custom_call.1} parent=1 // pred_check
      _
    $region15: #{tpu_custom_call.1} parent=1 // pred_check_branch
      %42 = sbr.rel (0) target = $region17
    $region16: #{tpu_custom_call.1} parent=1 // pred_region
      %43 = dma.done [#allocation4], 32
    $region17: #{tpu_custom_call.1} parent=1 // pred_fallthru
      _
    %44 = vsyncpa [#allocation3], 1
    %45 = vsyncpa [#allocation4], 1

</llo_original>
